<compile_context>
chip_gen: v5e
topology: v5e:2x2
jax: 0.10.0
libtpu: 0.0.40
codegen_flags: <defaults>
</compile_context>

<pallas_src>
import jax
import jax.numpy as jnp
from jax.experimental import pallas as pl
from jax.experimental.pallas import tpu as pltpu


def mlp_kernel(x_ref, w1_ref, b1_ref, w2_ref, b2_ref, w3_ref, b3_ref, o_ref):
    # x_ref: (7, TB) — features on sublanes, batch on lanes.
    x = x_ref[...]

    # fc1 + ReLU : (10,7) @ (7,TB) -> (10,TB)
    h1 = jnp.dot(w1_ref[...], x, preferred_element_type=jnp.float32) + b1_ref[...]
    h1 = jnp.maximum(h1, 0.0)

    # fc2 + ReLU : (10,10) @ (10,TB) -> (10,TB)
    h2 = jnp.dot(w2_ref[...], h1, preferred_element_type=jnp.float32) + b2_ref[...]
    h2 = jnp.maximum(h2, 0.0)

    # fc3 + sigmoid : (6,10) @ (10,TB) -> (6,TB)
    z = jnp.dot(w3_ref[...], h2, preferred_element_type=jnp.float32) + b3_ref[...]
    o_ref[...] = jax.nn.sigmoid(z)


def net_forward(x, params, *, tb=1024):
    """x: (B, 7) float32. params: w{k}: (out, in), b{k}: (out, 1).  Returns (B, 6)."""
    B = x.shape[0]
    in_f, out_f = 7, 6

    # Batch tile (lane dim): multiple of 128, at most `tb`, no larger than needed.
    tile_b = max(128, min(tb, ((B + 127) // 128) * 128))
    b_pad = ((B + tile_b - 1) // tile_b) * tile_b
    grid = (b_pad // tile_b,)

    # Lane-dense input: (7, B_pad), zero-padded rows beyond B are discarded later.
    xt = jnp.zeros((in_f, b_pad), dtype=jnp.float32).at[:, :B].set(x.T)

    const = lambda i: (0, 0)  # weights/biases: resident, same block every step
    out_t = pl.pallas_call(
        mlp_kernel,
        out_shape=jax.ShapeDtypeStruct((out_f, b_pad), jnp.float32),
        grid=grid,
        in_specs=[
            pl.BlockSpec((in_f, tile_b), lambda i: (0, i)),   # x tile
            pl.BlockSpec((10, 7), const),                     # w1
            pl.BlockSpec((10, 1), const),                     # b1
            pl.BlockSpec((10, 10), const),                    # w2
            pl.BlockSpec((10, 1), const),                     # b2
            pl.BlockSpec((6, 10), const),                     # w3
            pl.BlockSpec((6, 1), const),                      # b3
        ],
        out_specs=pl.BlockSpec((out_f, tile_b), lambda i: (0, i)),
        compiler_params=pltpu.CompilerParams(
            dimension_semantics=("parallel",),   # lets v7x shard batch over 2 TCs
            vmem_limit_bytes=32 * 1024 * 1024,   # explicit; safe on v5e/v6e/v7x
        ),
    )(
        xt,
        params["w1"], params["b1"],
        params["w2"], params["b2"],
        params["w3"], params["b3"],
    )
    return out_t[:, :B].T


def init_params(key):
    """Deterministic init mirroring nn.Linear default: U(-1/sqrt(fan_in), ...).

    Weights stored PyTorch-style as (out_features, in_features); biases as
    (out_features, 1) so they broadcast along the lane (batch) axis in-kernel.
    """
    dims = [(7, 10), (10, 10), (10, 6)]
    params = {}
    keys = jax.random.split(key, 2 * len(dims))
    for i, (fan_in, fan_out) in enumerate(dims):
        bound = 1.0 / jnp.sqrt(float(fan_in))
        w = jax.random.uniform(keys[2 * i], (fan_out, fan_in), jnp.float32,
                               minval=-bound, maxval=bound)
        b = jax.random.uniform(keys[2 * i + 1], (fan_out, 1), jnp.float32,
                               minval=-bound, maxval=bound)
        params[f"w{i + 1}"] = w
        params[f"b{i + 1}"] = b
    return params


def net_forward_ref(x, params):
    """Pure-JAX reference (standard row-major formulation) for correctness check."""
    h1 = jnp.maximum(x @ params["w1"].T + params["b1"].T, 0.0)
    h2 = jnp.maximum(h1 @ params["w2"].T + params["b2"].T, 0.0)
    return jax.nn.sigmoid(h2 @ params["w3"].T + params["b3"].T)


if __name__ == "__main__":
    key = jax.random.PRNGKey(0)
    pkey, xkey = jax.random.split(key)
    params = init_params(pkey)

    B = 8  # small batch (tile auto-clamps to 128 lanes)
    x = jax.random.normal(xkey, (B, 7), dtype=jnp.float32)

    out = net_forward(x, params)
    out = jax.block_until_ready(out)

    ref = net_forward_ref(x, params)
    assert out.shape == (B, 6)
    assert jnp.allclose(out, ref, atol=1e-5, rtol=1e-5)

    print("KERNEL_OK")
</pallas_src>

<mosaic_0001>
module attributes {stable_mosaic.version = 11 : i64} {
  func.func @mlp_kernel(%arg0: i32, %arg1: memref<7x128xf32, #tpu.memory_space<vmem>>, %arg2: memref<10x7xf32, #tpu.memory_space<vmem>>, %arg3: memref<10x1xf32, #tpu.memory_space<vmem>>, %arg4: memref<10x10xf32, #tpu.memory_space<vmem>>, %arg5: memref<10x1xf32, #tpu.memory_space<vmem>>, %arg6: memref<6x10xf32, #tpu.memory_space<vmem>>, %arg7: memref<6x1xf32, #tpu.memory_space<vmem>>, %arg8: memref<6x128xf32, #tpu.memory_space<vmem>>) attributes {dimension_semantics = [#tpu.dimension_semantics<parallel>], iteration_bounds = array<i64: 1>, scalar_prefetch = 0 : i64, scratch_operands = 0 : i64, tpu.core_type = #tpu.core_type<tc>, window_params = [{transform_indices = @transform_0, window_bounds = array<i64: 7, 128>}, {pipeline_mode = #tpu.pipeline_mode<synchronous>, transform_indices = @transform_1, window_bounds = array<i64: 10, 7>}, {pipeline_mode = #tpu.pipeline_mode<synchronous>, transform_indices = @transform_2, window_bounds = array<i64: 10, 1>}, {pipeline_mode = #tpu.pipeline_mode<synchronous>, transform_indices = @transform_3, window_bounds = array<i64: 10, 10>}, {pipeline_mode = #tpu.pipeline_mode<synchronous>, transform_indices = @transform_4, window_bounds = array<i64: 10, 1>}, {pipeline_mode = #tpu.pipeline_mode<synchronous>, transform_indices = @transform_5, window_bounds = array<i64: 6, 10>}, {pipeline_mode = #tpu.pipeline_mode<synchronous>, transform_indices = @transform_6, window_bounds = array<i64: 6, 1>}, {transform_indices = @transform_7, window_bounds = array<i64: 6, 128>}]} {
    %c0 = arith.constant 0 : index
    %c0_0 = arith.constant 0 : index
    %0 = vector.load %arg1[%c0, %c0_0] : memref<7x128xf32, #tpu.memory_space<vmem>>, vector<7x128xf32>
    %c0_1 = arith.constant 0 : index
    %c0_2 = arith.constant 0 : index
    %1 = vector.load %arg2[%c0_1, %c0_2] : memref<10x7xf32, #tpu.memory_space<vmem>>, vector<10x7xf32>
    %cst = arith.constant dense<0.000000e+00> : vector<10x128xf32>
    %2 = tpu.matmul %1, %0, %cst {dimension_numbers = #tpu.dot_dimension_numbers<[1], [0], [0], [1], [0, 0, 1, 1], [], []>} : vector<10x7xf32>, vector<7x128xf32>, vector<10x128xf32> -> vector<10x128xf32>
    %c0_3 = arith.constant 0 : index
    %c0_4 = arith.constant 0 : index
    %3 = vector.load %arg3[%c0_3, %c0_4] : memref<10x1xf32, #tpu.memory_space<vmem>>, vector<10x1xf32>
    %4 = vector.broadcast %3 : vector<10x1xf32> to vector<10x128xf32>
    %5 = arith.addf %2, %4 : vector<10x128xf32>
    %cst_5 = arith.constant 0.000000e+00 : f32
    %6 = vector.broadcast %cst_5 : f32 to vector<10x128xf32>
    %7 = arith.maximumf %5, %6 : vector<10x128xf32>
    %c0_6 = arith.constant 0 : index
    %c0_7 = arith.constant 0 : index
    %8 = vector.load %arg4[%c0_6, %c0_7] : memref<10x10xf32, #tpu.memory_space<vmem>>, vector<10x10xf32>
    %cst_8 = arith.constant dense<0.000000e+00> : vector<10x128xf32>
    %9 = tpu.matmul %8, %7, %cst_8 {dimension_numbers = #tpu.dot_dimension_numbers<[1], [0], [0], [1], [0, 0, 1, 1], [], []>} : vector<10x10xf32>, vector<10x128xf32>, vector<10x128xf32> -> vector<10x128xf32>
    %c0_9 = arith.constant 0 : index
    %c0_10 = arith.constant 0 : index
    %10 = vector.load %arg5[%c0_9, %c0_10] : memref<10x1xf32, #tpu.memory_space<vmem>>, vector<10x1xf32>
    %11 = vector.broadcast %10 : vector<10x1xf32> to vector<10x128xf32>
    %12 = arith.addf %9, %11 : vector<10x128xf32>
    %cst_11 = arith.constant 0.000000e+00 : f32
    %13 = vector.broadcast %cst_11 : f32 to vector<10x128xf32>
    %14 = arith.maximumf %12, %13 : vector<10x128xf32>
    %c0_12 = arith.constant 0 : index
    %c0_13 = arith.constant 0 : index
    %15 = vector.load %arg6[%c0_12, %c0_13] : memref<6x10xf32, #tpu.memory_space<vmem>>, vector<6x10xf32>
    %cst_14 = arith.constant dense<0.000000e+00> : vector<6x128xf32>
    %16 = tpu.matmul %15, %14, %cst_14 {dimension_numbers = #tpu.dot_dimension_numbers<[1], [0], [0], [1], [0, 0, 1, 1], [], []>} : vector<6x10xf32>, vector<10x128xf32>, vector<6x128xf32> -> vector<6x128xf32>
    %c0_15 = arith.constant 0 : index
    %c0_16 = arith.constant 0 : index
    %17 = vector.load %arg7[%c0_15, %c0_16] : memref<6x1xf32, #tpu.memory_space<vmem>>, vector<6x1xf32>
    %18 = vector.broadcast %17 : vector<6x1xf32> to vector<6x128xf32>
    %19 = arith.addf %16, %18 : vector<6x128xf32>
    %20 = arith.negf %19 : vector<6x128xf32>
    %21 = math.exp %20 : vector<6x128xf32>
    %cst_17 = arith.constant 1.000000e+00 : f32
    %22 = vector.broadcast %cst_17 : f32 to vector<6x128xf32>
    %23 = arith.addf %22, %21 : vector<6x128xf32>
    %24 = arith.divf %22, %23 : vector<6x128xf32>
    %c0_18 = arith.constant 0 : index
    %c0_19 = arith.constant 0 : index
    %25 = vector.load %arg8[%c0_18, %c0_19] : memref<6x128xf32, #tpu.memory_space<vmem>>, vector<6x128xf32>
    tpu.vector_store %arg8[%c0_18, %c0_19], %24 {strides = array<i32>} : memref<6x128xf32, #tpu.memory_space<vmem>>, vector<6x128xf32>,
    return
  }
  func.func @transform_0(%arg0: i32) -> (i32, i32) {
    %c0_i32 = arith.constant 0 : i32
    %c0_i32_0 = arith.constant 0 : i32
    return %c0_i32, %arg0 : i32, i32
  }
  func.func @transform_1(%arg0: i32) -> (i32, i32) {
    %c0_i32 = arith.constant 0 : i32
    %c0_i32_0 = arith.constant 0 : i32
    %c0_i32_1 = arith.constant 0 : i32
    return %c0_i32, %c0_i32_0 : i32, i32
  }
  func.func @transform_2(%arg0: i32) -> (i32, i32) {
    %c0_i32 = arith.constant 0 : i32
    %c0_i32_0 = arith.constant 0 : i32
    %c0_i32_1 = arith.constant 0 : i32
    return %c0_i32, %c0_i32_0 : i32, i32
  }
  func.func @transform_3(%arg0: i32) -> (i32, i32) {
    %c0_i32 = arith.constant 0 : i32
    %c0_i32_0 = arith.constant 0 : i32
    %c0_i32_1 = arith.constant 0 : i32
    return %c0_i32, %c0_i32_0 : i32, i32
  }
  func.func @transform_4(%arg0: i32) -> (i32, i32) {
    %c0_i32 = arith.constant 0 : i32
    %c0_i32_0 = arith.constant 0 : i32
    %c0_i32_1 = arith.constant 0 : i32
    return %c0_i32, %c0_i32_0 : i32, i32
  }
  func.func @transform_5(%arg0: i32) -> (i32, i32) {
    %c0_i32 = arith.constant 0 : i32
    %c0_i32_0 = arith.constant 0 : i32
    %c0_i32_1 = arith.constant 0 : i32
    return %c0_i32, %c0_i32_0 : i32, i32
  }
  func.func @transform_6(%arg0: i32) -> (i32, i32) {
    %c0_i32 = arith.constant 0 : i32
    %c0_i32_0 = arith.constant 0 : i32
    %c0_i32_1 = arith.constant 0 : i32
    return %c0_i32, %c0_i32_0 : i32, i32
  }
  func.func @transform_7(%arg0: i32) -> (i32, i32) {
    %c0_i32 = arith.constant 0 : i32
    %c0_i32_0 = arith.constant 0 : i32
    return %c0_i32, %arg0 : i32, i32
  }
}

</mosaic_0001>

<llo_original>
// kernel: tpu_custom_call.1
$region0: #{tpu_custom_call.1}
  #allocation0 [shape = 'u32[]', space=smem, size = 0x4, offset = 0x4, fixed_abs, tag = 'smem constant byte address 0x4 - core index']
  #allocation1 [shape = 'u32[72,128]{1,0:T(1,128)}', space=vmem, size = 0x9000, scoped, tag = 'internal scratch']
  %s0 = inlined_call_operand.vmem [shape: f32[7,128], index: 0, kind: input, shape index: {}]
  %s1 = inlined_call_operand.vmem [shape: f32[10,7], index: 1, kind: input, shape index: {}]
  %s2 = inlined_call_operand.vmem [shape: f32[10,1], index: 2, kind: input, shape index: {}]
  %s3 = inlined_call_operand.vmem [shape: f32[10,10], index: 3, kind: input, shape index: {}]
  %s4 = inlined_call_operand.vmem [shape: f32[10,1], index: 4, kind: input, shape index: {}]
  %s5 = inlined_call_operand.vmem [shape: f32[6,10], index: 5, kind: input, shape index: {}]
  %s6 = inlined_call_operand.vmem [shape: f32[6,1], index: 6, kind: input, shape index: {}]
  %s7 = inlined_call_operand.hbm [shape: f32[6,128], index: 7, kind: output, shape index: {}]
  %s8 = sld [smem:[#allocation0]]
  $region38: #{tpu_custom_call.1} parent=0
    _
  %s10 = ssub.s32 1, %s8
  %s11 = scalar_select 0, %s10, %s8
  $region1: #{tpu_custom_call.1} parent=0
    #allocation2 [shape = 'u8[4096]{0}', space=vmem, size = 0x1000, scoped, tag = 'output window, operand 0, single buffered']
    #allocation3 [shape = 's32[1]{0}', space=sflag, size = 0x4, scoped, tag = 'scoped memory for tpu_custom_call.1']
    %12 = vsyncpa [#allocation3], 0
    // Predicated region
    $region2: #{tpu_custom_call.1} parent=1 // pred_check
      _
    $region3: #{tpu_custom_call.1} parent=1 // pred_check_branch
      %14 = sbr.rel (0) target = $region5
    $region4: #{tpu_custom_call.1} parent=1 // pred_region
      _
    $region5: #{tpu_custom_call.1} parent=1 // pred_fallthru
      _
    // Predicated region
    $region6: #{tpu_custom_call.1} parent=1 // pred_check
      _
    $region7: #{tpu_custom_call.1} parent=1 // pred_check_branch
      %16 = sbr.rel (0) target = $region9
    $region8: #{tpu_custom_call.1} parent=1 // pred_region
      _
    $region9: #{tpu_custom_call.1} parent=1 // pred_fallthru
      _
    // Predicated region
    $region10: #{tpu_custom_call.1} parent=1 // pred_check
      _
    $region11: #{tpu_custom_call.1} parent=1 // pred_check_branch
      %18 = sbr.rel (0) target = $region13
    $region12: #{tpu_custom_call.1} parent=1 // pred_region
      _
    $region13: #{tpu_custom_call.1} parent=1 // pred_fallthru
      _
    // Predicated region
    $region14: #{tpu_custom_call.1} parent=1 // pred_check
      _
    $region15: #{tpu_custom_call.1} parent=1 // pred_check_branch
      %20 = sbr.rel (0) target = $region17
    $region16: #{tpu_custom_call.1} parent=1 // pred_region
      _
    $region17: #{tpu_custom_call.1} parent=1 // pred_fallthru
      _
    // Predicated region
    $region18: #{tpu_custom_call.1} parent=1 // pred_check
      _
    $region19: #{tpu_custom_call.1} parent=1 // pred_check_branch
      %22 = sbr.rel (0) target = $region21
    $region20: #{tpu_custom_call.1} parent=1 // pred_region
      _
    $region21: #{tpu_custom_call.1} parent=1 // pred_fallthru
      _
    // Predicated region
    $region22: #{tpu_custom_call.1} parent=1 // pred_check
      _
    $region23: #{tpu_custom_call.1} parent=1 // pred_check_branch
      %24 = sbr.rel (0) target = $region25
    $region24: #{tpu_custom_call.1} parent=1 // pred_region
      _
    $region25: #{tpu_custom_call.1} parent=1 // pred_fallthru
      _
    // Predicated region
    $region26: #{tpu_custom_call.1} parent=1 // pred_check
      _
    $region27: #{tpu_custom_call.1} parent=1 // pred_check_branch
      %26 = sbr.rel (0) target = $region29
    $region28: #{tpu_custom_call.1} parent=1 // pred_region
      _
    $region29: #{tpu_custom_call.1} parent=1 // pred_fallthru
      _
    %v27 = vld [vmem:[%s0] sm:$0x7f]
    %v28 = vld [vmem:[%s1] sm:$0xff]
    %v29 = vld [vmem:[%s1 + $0x8] sm:$0x3]
    %v30 = vld [vmem:[%s2] sm:$0xff]
    %v31 = vld [vmem:[%s2 + $0x8] sm:$0x3]
    %33 = vset.pattern.permute.xlu0 0
    %34 = vperm.xlu0 %33, %v30
    %v35 = vpop.permute.xlu0 %34
    %38 = vset.pattern.permute.xlu0 0
    %39 = vperm.xlu0 %38, %v31
    %v40 = vpop.permute.xlu0 %39
    %vm42 = vcmask 56320
    %v44 = vsel %vm42, %v28, 0
    %v47 = vsel %vm42, %v29, 0
    %vm49 = vcmask 1046528
    %v51 = vsel %vm49, %v27, 0
    %53 = vmatpush.msra.mxu0 0.0
    %54 = vmatpush.msra.mxu0 0.0
    %55 = vmatpush.msra.mxu0 0.0
    %56 = vmatpush.msra.mxu0 0.0
    %57 = vmatpush.msra.mxu0 0.0
    %58 = vmatpush.msra.mxu0 0.0
    %59 = vmatpush.msra.mxu0 0.0
    %60 = vmatpush.msra.mxu0 0.0
    %61 = vmatpush.msra.mxu0 0.0
    %62 = vmatpush.msra.mxu0 0.0
    %63 = vmatpush.msra.mxu0 0.0
    %64 = vmatpush.msra.mxu0 0.0
    %65 = vmatpush.msra.mxu0 0.0
    %66 = vmatpush.msra.mxu0 0.0
    %67 = vmatpush.msra.mxu0 0.0
    %68 = vmatpush.msra.mxu0 %v51
    %69 = vmatmul.f32.gmra.mxu0 %v44
    %v70 = vpop.f32.mrf.mxu0
    %v71 = vadd.f32 %v35, %v70
    %72 = vmatmul.f32.gmra.mxu0 %v47
    %v73 = vpop.f32.mrf.mxu0
    %v74 = vadd.f32 %v40, %v73
    %75 = vdwg.mxu0
    %v76 = vmax.f32 %v71, 0.0
    %v77 = vmax.f32 %v74, 0.0
    %v78 = vld [vmem:[%s3] sm:$0xff]
    %v79 = vld [vmem:[%s3 + $0x8] sm:$0x3]
    %v80 = vld [vmem:[%s4] sm:$0xff]
    %v81 = vld [vmem:[%s4 + $0x8] sm:$0x3]
    %83 = vset.pattern.permute.xlu0 0
    %84 = vperm.xlu0 %83, %v80
    %v85 = vpop.permute.xlu0 %84
    %88 = vset.pattern.permute.xlu0 0
    %89 = vperm.xlu0 %88, %v81
    %v90 = vpop.permute.xlu0 %89
    %vm92 = vcmask 80896
    %v94 = vsel %vm92, %v78, 0
    %v97 = vsel %vm92, %v79, 0
    %vm99 = vcmask 1041408
    %v101 = vsel %vm99, %v77, 0
    %103 = vmatpush.msra.mxu0 0.0
    %104 = vmatpush.msra.mxu0 0.0
    %105 = vmatpush.msra.mxu0 0.0
    %106 = vmatpush.msra.mxu0 0.0
    %107 = vmatpush.msra.mxu0 0.0
    %108 = vmatpush.msra.mxu0 0.0
    %109 = vmatpush.msra.mxu0 0.0
    %110 = vmatpush.msra.mxu0 0.0
    %111 = vmatpush.msra.mxu0 0.0
    %112 = vmatpush.msra.mxu0 0.0
    %113 = vmatpush.msra.mxu0 0.0
    %114 = vmatpush.msra.mxu0 0.0
    %115 = vmatpush.msra.mxu0 0.0
    %116 = vmatpush.msra.mxu0 0.0
    %117 = vmatpush.msra.mxu0 %v101
    %118 = vmatpush.msra.mxu0 %v76
    %119 = vmatmul.f32.gmra.mxu0 %v94
    %v120 = vpop.f32.mrf.mxu0
    %v121 = vadd.f32 %v85, %v120
    %122 = vmatmul.f32.gmra.mxu0 %v97
    %v123 = vpop.f32.mrf.mxu0
    %v124 = vadd.f32 %v90, %v123
    %125 = vdwg.mxu0
    %v126 = vmax.f32 %v121, 0.0
    %v127 = vmax.f32 %v124, 0.0
    %v128 = vld [vmem:[%s5] sm:$0x3f]
    %v129 = vld [vmem:[%s6] sm:$0x3f]
    %131 = vset.pattern.permute.xlu0 0
    %132 = vperm.xlu0 %131, %v129
    %v133 = vpop.permute.xlu0 %132
    %v136 = vsel %vm92, %v128, 0
    %v139 = vsel %vm99, %v127, 0
    %141 = vmatpush.msra.mxu0 0.0
    %142 = vmatpush.msra.mxu0 0.0
    %143 = vmatpush.msra.mxu0 0.0
    %144 = vmatpush.msra.mxu0 0.0
    %145 = vmatpush.msra.mxu0 0.0
    %146 = vmatpush.msra.mxu0 0.0
    %147 = vmatpush.msra.mxu0 0.0
    %148 = vmatpush.msra.mxu0 0.0
    %149 = vmatpush.msra.mxu0 0.0
    %150 = vmatpush.msra.mxu0 0.0
    %151 = vmatpush.msra.mxu0 0.0
    %152 = vmatpush.msra.mxu0 0.0
    %153 = vmatpush.msra.mxu0 0.0
    %154 = vmatpush.msra.mxu0 0.0
    %155 = vmatpush.msra.mxu0 %v139
    %156 = vmatpush.msra.mxu0 %v126
    %157 = vmatmul.f32.gmra.mxu0 %v136
    %v158 = vpop.f32.mrf.mxu0
    %v159 = vadd.f32 %v133, %v158
    %160 = vdwg.mxu0
    %v161 = vxor.u32 %v159, 2147483648
    %v162 = vmul.f32 %v161, 1.442695
    %v163 = vpow.pop %v162
    %v164 = vadd.f32 %v163, 1.0
    %v165 = vrcp.pop %v164
    %v166 = vmul.f32 %v164, %v165
    %v167 = vsub.f32 1.0, %v166
    %v168 = vmul.f32 %v165, %v167
    %v169 = vadd.f32 %v165, %v168
    %vm170 = vweird.f32 %v164
    %vm171 = vweird.f32 %v165
    %vm172 = vmor %vm170, %vm171
    %v173 = vsel %vm172, %v165, %v169
    %v174 = vand.u32 2147483647, %v164
    %vm175 = vcmp.eq.f32.partialorder %v174, 8.507059e+37
    %v176 = vand.u32 %v164, 2147483648
    %v177 = vor.u32 1.1754944e-38, %v176
    %v178 = vsel %vm175, %v177, %v173
    %v179 = vmul.f32 1.0, %v178
    %180 = vst [vmem:[#allocation2] sm:$0x3f] %v179
    // Predicated region
    $region30: #{tpu_custom_call.1} parent=1 // pred_check
      _
    $region31: #{tpu_custom_call.1} parent=1 // pred_check_branch
      %182 = sbr.rel (0) target = $region33
    $region32: #{tpu_custom_call.1} parent=1 // pred_region
      %184 = vsyncadd [#allocation3], 0
      %s186 = sshll.u32 [#allocation2], 4
      %s187 = int_to_ptr.vmem [resolvable:$true] %s186
      %s188 = sshll.u32 %s7, 4
      %s189 = int_to_ptr.hbm [resolvable:$true] %s188
      %191 = dma.vmem_to_hbm [thread:$0]  %s187, 128, %s189, [#allocation3]
    $region33: #{tpu_custom_call.1} parent=1 // pred_fallthru
      _
    // Predicated region
    $region34: #{tpu_custom_call.1} parent=1 // pred_check
      _
    $region35: #{tpu_custom_call.1} parent=1 // pred_check_branch
      %193 = sbr.rel (0) target = $region37
    $region36: #{tpu_custom_call.1} parent=1 // pred_region
      %195 = dma.done [#allocation3], 128
    $region37: #{tpu_custom_call.1} parent=1 // pred_fallthru
      _
    %196 = vsyncpa [#allocation3], 1

</llo_original>
